<compile_context>
chip_gen: v7x
topology: tpu7x:2x2x1
jax: 0.10.0
libtpu: 0.0.40
codegen_flags: <defaults>
</compile_context>

<pallas_src>
import functools

import jax
import jax.numpy as jnp
from jax.experimental import pallas as pl
from jax.experimental.pallas import tpu as pltpu


def _prompt_kernel(base_ref,   # (L, D)      pair-invariant base (resident across steps)
                   verb_ref,   # (TP, 1, D)  per-pair verb row (+ its positional row)
                   obj_ref,    # (TP, 1, D)  per-pair obj row  (+ its positional row)
                   out_ref,    # (TP, L, D)  output block for TP pairs
                   *, n_head, n_mid):
    TP, L, D = out_ref.shape
    v_row = n_head + 1                 # static Python ints -> static slices
    o_row = n_head + 2 + n_mid
    base = base_ref[...]
    odt = out_ref.dtype

    def store_slab(lo, hi):
        if hi > lo:                    # static guard: skip empty slabs
            slab = base[lo:hi, :].astype(odt)
            out_ref[:, lo:hi, :] = jnp.broadcast_to(slab[None, :, :],
                                                    (TP, hi - lo, D))

    # Each output row is written exactly once (no broadcast-then-overwrite).
    store_slab(0, v_row)
    out_ref[:, v_row:v_row + 1, :] = verb_ref[...].astype(odt)
    store_slab(v_row + 1, o_row)
    out_ref[:, o_row:o_row + 1, :] = obj_ref[...].astype(odt)
    store_slab(o_row + 1, L)


def composition_prompt_forward(pair_idx, token_ids, table, head, mid,
                               verb_emb, obj_emb, pos, *,
                               n_head, n_mid,
                               out_dtype=jnp.float32,
                               target_block_bytes=2 << 20,   # ~2 MiB output blocks
                               vmem_budget_bytes=12 << 20,   # 2x block must fit v5e scoped VMEM
                               min_pallas_out_bytes=1 << 20, # tiny-problem gate
                               force_pallas=False):
    """pair_idx: (P, 2) int32 [verb_idx, obj_idx].  Returns (P, L, D)."""
    P = pair_idx.shape[0]
    L = token_ids.shape[0]
    D = table.shape[1]

    # ---- pair-invariant precompute (done once, not P times) ----------------
    base = jnp.take(table, token_ids, axis=0)                  # (L, D) row gather
    base = base.at[1:1 + n_head].set(head)                     # prompt head slots
    base = base.at[n_head + 2:n_head + 2 + n_mid].set(mid)     # prompt mid slots
    base = base + pos[0]                                       # fold positional emb

    # ---- per-pair gathers: trivial XLA takes, positional rows pre-folded ---
    verb_rows = verb_emb[pair_idx[:, 0], 0, :] + pos[0, n_head + 1, :]          # (P, D)
    obj_rows = obj_emb[pair_idx[:, 1], 0, :] + pos[0, n_head + 2 + n_mid, :]    # (P, D)

    out_itemsize = jnp.dtype(out_dtype).itemsize
    out_bytes = P * L * D * out_itemsize

    # ---- tiny-problem gate: fused XLA path when launch cost > traffic ------
    if P == 0 or (not force_pallas and out_bytes < min_pallas_out_bytes):
        full = jnp.broadcast_to(base[None, :, :], (P, L, D)).astype(out_dtype)
        full = full.at[:, n_head + 1, :].set(verb_rows.astype(out_dtype))
        full = full.at[:, n_head + 2 + n_mid, :].set(obj_rows.astype(out_dtype))
        return full

    verb_rows = verb_rows[:, None, :]                           # (P, 1, D)
    obj_rows = obj_rows[:, None, :]                             # (P, 1, D)

    # ---- TP sizing: ~2 MiB output blocks, VMEM-safe, grid >= 2 for v7x -----
    bytes_per_pair = L * D * out_itemsize
    tp = max(1, target_block_bytes // bytes_per_pair)
    tp = min(tp, max(1, vmem_budget_bytes // (2 * bytes_per_pair)))  # dbl-buffered out
    tp = min(tp, max(1, pl.cdiv(P, 2)))   # keep >= 2 grid blocks when P allows
    tp = int(min(tp, P))
    grid = pl.cdiv(P, tp)                 # no padding: Pallas clips ragged last block

    kernel = functools.partial(_prompt_kernel, n_head=n_head, n_mid=n_mid)

    # Purely memory-bound custom call: zero flops, bytes ~= out + rows + base.
    cost = pl.CostEstimate(
        flops=0, transcendentals=0,
        bytes_accessed=int(out_bytes
                           + L * D * base.dtype.itemsize
                           + 2 * P * D * verb_rows.dtype.itemsize))

    out = pl.pallas_call(
        kernel,
        out_shape=jax.ShapeDtypeStruct((P, L, D), out_dtype),
        grid_spec=pl.GridSpec(
            grid=(grid,),
            in_specs=[
                # base: identical block every step -> stays resident, no re-DMA
                pl.BlockSpec((L, D), lambda i: (0, 0)),
                pl.BlockSpec((tp, 1, D), lambda i: (i, 0, 0)),  # verb rows of block i
                pl.BlockSpec((tp, 1, D), lambda i: (i, 0, 0)),  # obj rows of block i
            ],
            out_specs=pl.BlockSpec((tp, L, D), lambda i: (i, 0, 0)),
        ),
        compiler_params=pltpu.CompilerParams(
            dimension_semantics=("parallel",)),   # shards pair axis over v7x's 2 TCs
        cost_estimate=cost,
    )(base, verb_rows, obj_rows)
    return out


def reference_forward(pair_idx, token_ids, table, head, mid,
                      verb_emb, obj_emb, pos, *, n_head, n_mid):
    P = pair_idx.shape[0]
    class_ids = jnp.tile(token_ids[None, :], (P, 1))            # (P, L)
    tok = table[class_ids]                                      # (P, L, D)
    tok = tok.at[:, 1:1 + n_head].set(head)
    tok = tok.at[:, n_head + 1:n_head + 2].set(verb_emb[pair_idx[:, 0]])
    tok = tok.at[:, n_head + 2:n_head + 2 + n_mid].set(mid)
    tok = tok.at[:, n_head + 2 + n_mid:n_head + 3 + n_mid].set(obj_emb[pair_idx[:, 1]])
    return tok + pos


if __name__ == "__main__":
    # small synthetic sizes consistent with the module's forward
    V, D, L = 512, 128, 16          # vocab, embedding dim, ctx_length
    n_head, n_mid = 2, 3            # prompt template head / mid lengths
    n_verbs, n_objs = 6, 5
    P = 20                          # number of (verb, obj) pairs in the batch

    key = jax.random.PRNGKey(0)
    k1, k2, k3, k4, k5, k6, k7, k8 = jax.random.split(key, 8)

    table     = jax.random.normal(k1, (V, D), dtype=jnp.float32)        # token_embedding.weight
    token_ids = jax.random.randint(k2, (L,), 0, V, dtype=jnp.int32)     # tokenized template
    head      = jax.random.normal(k3, (n_head, D), dtype=jnp.float32)   # prompt_vectors_head
    mid       = jax.random.normal(k4, (n_mid, D), dtype=jnp.float32)    # prompt_vectors_mid
    verb_emb  = jax.random.normal(k5, (n_verbs, 1, D), dtype=jnp.float32)
    obj_emb   = jax.random.normal(k6, (n_objs, 1, D), dtype=jnp.float32)
    pos       = jax.random.normal(k7, (1, L, D), dtype=jnp.float32)     # positional_embedding

    verb_idx = jax.random.randint(k8, (P,), 0, n_verbs, dtype=jnp.int32)
    obj_idx = jax.random.randint(jax.random.fold_in(k8, 1), (P,), 0, n_objs, dtype=jnp.int32)
    pair_idx = jnp.stack([verb_idx, obj_idx], axis=1)                   # (P, 2)

    # Force the Pallas path at demo sizes so the kernel is compiled & verified.
    fwd = jax.jit(functools.partial(composition_prompt_forward,
                                    n_head=n_head, n_mid=n_mid,
                                    force_pallas=True))
    out = jax.block_until_ready(fwd(pair_idx, token_ids, table, head, mid,
                                    verb_emb, obj_emb, pos))

    ref = reference_forward(pair_idx, token_ids, table, head, mid,
                            verb_emb, obj_emb, pos,
                            n_head=n_head, n_mid=n_mid)

    assert out.shape == (P, L, D)
    assert jnp.allclose(out, ref, atol=1e-5, rtol=1e-5), "mismatch vs reference"
    print("KERNEL_OK")
</pallas_src>

<mosaic_0001>
module attributes {stable_mosaic.version = 11 : i64} {
  func.func @_prompt_kernel(%arg0: i32, %arg1: memref<16x128xf32, #tpu.memory_space<vmem>>, %arg2: memref<10x1x128xf32, #tpu.memory_space<vmem>>, %arg3: memref<10x1x128xf32, #tpu.memory_space<vmem>>, %arg4: memref<10x16x128xf32, #tpu.memory_space<vmem>>) attributes {dimension_semantics = [#tpu.dimension_semantics<parallel>], iteration_bounds = array<i64: 2>, scalar_prefetch = 0 : i64, scratch_operands = 0 : i64, tpu.core_type = #tpu.core_type<tc>, window_params = [{pipeline_mode = #tpu.pipeline_mode<synchronous>, transform_indices = @transform_0, window_bounds = array<i64: 16, 128>}, {transform_indices = @transform_1, window_bounds = array<i64: 10, 1, 128>}, {transform_indices = @transform_2, window_bounds = array<i64: 10, 1, 128>}, {transform_indices = @transform_3, window_bounds = array<i64: 10, 16, 128>}]} {
    %c0 = arith.constant 0 : index
    %c0_0 = arith.constant 0 : index
    %0 = vector.load %arg1[%c0, %c0_0] : memref<16x128xf32, #tpu.memory_space<vmem>>, vector<16x128xf32>
    %1 = vector.extract_strided_slice %0 {offsets = [0, 0], sizes = [3, 128], strides = [1, 1]} : vector<16x128xf32> to vector<3x128xf32>
    %2 = vector.shape_cast %1 : vector<3x128xf32> to vector<1x3x128xf32>
    %3 = vector.shape_cast %2 : vector<1x3x128xf32> to vector<1x3x128xf32>
    %4 = vector.broadcast %3 : vector<1x3x128xf32> to vector<10x3x128xf32>
    %c0_1 = arith.constant 0 : index
    %c0_2 = arith.constant 0 : index
    %c0_3 = arith.constant 0 : index
    %5 = vector.load %arg4[%c0_1, %c0_2, %c0_3] : memref<10x16x128xf32, #tpu.memory_space<vmem>>, vector<10x3x128xf32>
    tpu.vector_store %arg4[%c0_1, %c0_2, %c0_3], %4 {strides = array<i32>} : memref<10x16x128xf32, #tpu.memory_space<vmem>>, vector<10x3x128xf32>,
    %c0_4 = arith.constant 0 : index
    %c0_5 = arith.constant 0 : index
    %c0_6 = arith.constant 0 : index
    %6 = vector.load %arg2[%c0_4, %c0_5, %c0_6] : memref<10x1x128xf32, #tpu.memory_space<vmem>>, vector<10x1x128xf32>
    %c0_7 = arith.constant 0 : index
    %c3 = arith.constant 3 : index
    %c0_8 = arith.constant 0 : index
    %7 = vector.load %arg4[%c0_7, %c3, %c0_8] : memref<10x16x128xf32, #tpu.memory_space<vmem>>, vector<10x1x128xf32>
    tpu.vector_store %arg4[%c0_7, %c3, %c0_8], %6 {strides = array<i32>} : memref<10x16x128xf32, #tpu.memory_space<vmem>>, vector<10x1x128xf32>,
    %8 = vector.extract_strided_slice %0 {offsets = [4, 0], sizes = [3, 128], strides = [1, 1]} : vector<16x128xf32> to vector<3x128xf32>
    %9 = vector.shape_cast %8 : vector<3x128xf32> to vector<1x3x128xf32>
    %10 = vector.shape_cast %9 : vector<1x3x128xf32> to vector<1x3x128xf32>
    %11 = vector.broadcast %10 : vector<1x3x128xf32> to vector<10x3x128xf32>
    %c0_9 = arith.constant 0 : index
    %c4 = arith.constant 4 : index
    %c0_10 = arith.constant 0 : index
    %12 = vector.load %arg4[%c0_9, %c4, %c0_10] : memref<10x16x128xf32, #tpu.memory_space<vmem>>, vector<10x3x128xf32>
    tpu.vector_store %arg4[%c0_9, %c4, %c0_10], %11 {strides = array<i32>} : memref<10x16x128xf32, #tpu.memory_space<vmem>>, vector<10x3x128xf32>,
    %c0_11 = arith.constant 0 : index
    %c0_12 = arith.constant 0 : index
    %c0_13 = arith.constant 0 : index
    %13 = vector.load %arg3[%c0_11, %c0_12, %c0_13] : memref<10x1x128xf32, #tpu.memory_space<vmem>>, vector<10x1x128xf32>
    %c0_14 = arith.constant 0 : index
    %c7 = arith.constant 7 : index
    %c0_15 = arith.constant 0 : index
    %14 = vector.load %arg4[%c0_14, %c7, %c0_15] : memref<10x16x128xf32, #tpu.memory_space<vmem>>, vector<10x1x128xf32>
    tpu.vector_store %arg4[%c0_14, %c7, %c0_15], %13 {strides = array<i32>} : memref<10x16x128xf32, #tpu.memory_space<vmem>>, vector<10x1x128xf32>,
    %15 = vector.extract_strided_slice %0 {offsets = [8, 0], sizes = [8, 128], strides = [1, 1]} : vector<16x128xf32> to vector<8x128xf32>
    %16 = vector.shape_cast %15 : vector<8x128xf32> to vector<1x8x128xf32>
    %17 = vector.shape_cast %16 : vector<1x8x128xf32> to vector<1x8x128xf32>
    %18 = vector.broadcast %17 : vector<1x8x128xf32> to vector<10x8x128xf32>
    %c0_16 = arith.constant 0 : index
    %c8 = arith.constant 8 : index
    %c0_17 = arith.constant 0 : index
    %19 = vector.load %arg4[%c0_16, %c8, %c0_17] : memref<10x16x128xf32, #tpu.memory_space<vmem>>, vector<10x8x128xf32>
    tpu.vector_store %arg4[%c0_16, %c8, %c0_17], %18 {strides = array<i32>} : memref<10x16x128xf32, #tpu.memory_space<vmem>>, vector<10x8x128xf32>,
    return
  }
  func.func @transform_0(%arg0: i32) -> (i32, i32) {
    %c0_i32 = arith.constant 0 : i32
    %c0_i32_0 = arith.constant 0 : i32
    %c0_i32_1 = arith.constant 0 : i32
    return %c0_i32, %c0_i32_0 : i32, i32
  }
  func.func @transform_1(%arg0: i32) -> (i32, i32, i32) {
    %c0_i32 = arith.constant 0 : i32
    %c0_i32_0 = arith.constant 0 : i32
    %c0_i32_1 = arith.constant 0 : i32
    return %arg0, %c0_i32, %c0_i32_0 : i32, i32, i32
  }
  func.func @transform_2(%arg0: i32) -> (i32, i32, i32) {
    %c0_i32 = arith.constant 0 : i32
    %c0_i32_0 = arith.constant 0 : i32
    %c0_i32_1 = arith.constant 0 : i32
    return %arg0, %c0_i32, %c0_i32_0 : i32, i32, i32
  }
  func.func @transform_3(%arg0: i32) -> (i32, i32, i32) {
    %c0_i32 = arith.constant 0 : i32
    %c0_i32_0 = arith.constant 0 : i32
    %c0_i32_1 = arith.constant 0 : i32
    return %arg0, %c0_i32, %c0_i32_0 : i32, i32, i32
  }
}

</mosaic_0001>

<llo_original>
// kernel: composition_prompt_forward.1
$region0: #{composition_prompt_forward.1}
  #allocation0 [shape = 'u32[]', space=smem, size = 0x4, offset = 0x4, fixed_abs, tag = 'smem constant byte address 0x4 - core index']
  #allocation1 [shape = 'u32[144,128]{1,0:T(1,128)}', space=vmem, size = 0x12000, scoped, tag = 'internal scratch']
  %s0 = inlined_call_operand.vmem [shape: f32[16,128], index: 0, kind: input, shape index: {}]
  %s1 = inlined_call_operand.vmem [shape: f32[20,1,128], index: 1, kind: input, shape index: {}]
  %s2 = inlined_call_operand.vmem [shape: f32[20,1,128], index: 2, kind: input, shape index: {}]
  %s3 = inlined_call_operand.hbm [shape: f32[20,16,128], index: 3, kind: output, shape index: {}]
  %s4 = sld [smem:[#allocation0]]
  $region45: #{composition_prompt_forward.1} parent=0
    _
  %s6 = ssub.s32 1, %s4
  %s7 = scalar_select 0, %s6, %s4
  $region1: #{composition_prompt_forward.1} parent=0
    #allocation2 [shape = 'u8[163840]{0}', space=vmem, size = 0x28000, scoped, tag = 'output window, operand 0']
    #allocation3 [shape = 's32[2]{0}', space=sflag, size = 0x8, scoped, tag = 'scoped memory for composition_prompt_forward.1']
    %8 = vsyncpa [#allocation3], 0
    %s9 = scalar_lea.sflag [#allocation3], 1
    %10 = vsyncpa %s9, 0
    loop: start=0, step=1, limit=4
    $region2: #{composition_prompt_forward.1} parent=1 // loop_pre_header
      _
    $region3: #{composition_prompt_forward.1} parent=1 // loop_header
      %s12 = sphi 0, %s16
      %p13 = scmp.ge.s32.totalorder %s12, 4
      %s20 = sphi 0, %s20
      %s22 = sphi 0, %s20
      %s23 = sphi 0, %s22
      %s37 = sphi 0, %s23
      %s43 = sphi 0, %s45
      %s46 = sphi 0, %s43
      %s47 = sphi 0, %s46
      %s63 = sphi 0, %s47
      %s69 = sphi 0, %s71
      %s72 = sphi 0, %s69
      %s73 = sphi 0, %s72
      %s89 = sphi 0, %s73
      %s95 = sphi 0, %s97
      %s98 = sphi 0, %s95
      %s99 = sphi 0, %s98
      %s115 = sphi 0, %s99
    $region4: #{composition_prompt_forward.1} parent=1 // loop_header_branch
      %15 = sbr.rel (%p13) target = $region8
    $region5: #{composition_prompt_forward.1} parent=1 // loop_body
      %s17 = ssub.s32 %s12, 1
      %s18 = ssub.s32 %s12, 2
      %s19 = sadd.s32 %s12, 1
      %s21 = sadd.s32 %s20, 1
      %p24 = scmp.eq.s32.totalorder %s12, 1
      %p25 = scmp.ne.s32.totalorder %s20, %s22
      %p26 = scmp.eq.s32.totalorder %s12, 0
      %p27 = por %p25, %p26
      %p28 = scmp.ne.s32.totalorder %s20, %s22
      %p29 = scmp.eq.s32.totalorder %s17, 1
      %p30 = por %p28, %p29
      %p31 = scmp.ne.s32.totalorder %s22, %s23
      %p32 = scmp.eq.s32.totalorder %s17, 0
      %p33 = por %p31, %p32
      %p34 = scmp.ne.s32.totalorder %s22, %s23
      %p35 = scmp.eq.s32.totalorder %s18, 1
      %p36 = por %p34, %p35
      %p38 = scmp.ne.s32.totalorder %s23, %s37
      %p39 = scmp.eq.s32.totalorder %s18, 0
      %p40 = por %p38, %p39
      %s41 = ssub.s32 %s12, %s19
      %p42 = scmp.eq.s32.totalorder %s41, 0
      %s44 = sadd.s32 %s43, 1
      %s45 = scalar_select %p42, %s43, %s44
      %p48 = pneg %p42
      %p49 = scmp.eq.s32.totalorder %s12, 1
      %p50 = por %p48, %p49
      %p51 = scmp.ne.s32.totalorder %s43, %s46
      %p52 = scmp.eq.s32.totalorder %s12, 0
      %p53 = por %p51, %p52
      %p54 = scmp.ne.s32.totalorder %s43, %s46
      %p55 = scmp.eq.s32.totalorder %s17, 1
      %p56 = por %p54, %p55
      %p57 = scmp.ne.s32.totalorder %s46, %s47
      %p58 = scmp.eq.s32.totalorder %s17, 0
      %p59 = por %p57, %p58
      %p60 = scmp.ne.s32.totalorder %s46, %s47
      %p61 = scmp.eq.s32.totalorder %s18, 1
      %p62 = por %p60, %p61
      %p64 = scmp.ne.s32.totalorder %s47, %s63
      %p65 = scmp.eq.s32.totalorder %s18, 0
      %p66 = por %p64, %p65
      %s67 = ssub.s32 %s12, %s19
      %p68 = scmp.eq.s32.totalorder %s67, 0
      %s70 = sadd.s32 %s69, 1
      %s71 = scalar_select %p68, %s69, %s70
      %p74 = pneg %p68
      %p75 = scmp.eq.s32.totalorder %s12, 1
      %p76 = por %p74, %p75
      %p77 = scmp.ne.s32.totalorder %s69, %s72
      %p78 = scmp.eq.s32.totalorder %s12, 0
      %p79 = por %p77, %p78
      %p80 = scmp.ne.s32.totalorder %s69, %s72
      %p81 = scmp.eq.s32.totalorder %s17, 1
      %p82 = por %p80, %p81
      %p83 = scmp.ne.s32.totalorder %s72, %s73
      %p84 = scmp.eq.s32.totalorder %s17, 0
      %p85 = por %p83, %p84
      %p86 = scmp.ne.s32.totalorder %s72, %s73
      %p87 = scmp.eq.s32.totalorder %s18, 1
      %p88 = por %p86, %p87
      %p90 = scmp.ne.s32.totalorder %s73, %s89
      %p91 = scmp.eq.s32.totalorder %s18, 0
      %p92 = por %p90, %p91
      %s93 = ssub.s32 %s12, %s19
      %p94 = scmp.eq.s32.totalorder %s93, 0
      %s96 = sadd.s32 %s95, 1
      %s97 = scalar_select %p94, %s95, %s96
      %p100 = pneg %p94
      %p101 = scmp.eq.s32.totalorder %s12, 1
      %p102 = por %p100, %p101
      %p103 = scmp.ne.s32.totalorder %s95, %s98
      %p104 = scmp.eq.s32.totalorder %s12, 0
      %p105 = por %p103, %p104
      %p106 = scmp.ne.s32.totalorder %s95, %s98
      %p107 = scmp.eq.s32.totalorder %s17, 1
      %p108 = por %p106, %p107
      %p109 = scmp.ne.s32.totalorder %s98, %s99
      %p110 = scmp.eq.s32.totalorder %s17, 0
      %p111 = por %p109, %p110
      %p112 = scmp.ne.s32.totalorder %s98, %s99
      %p113 = scmp.eq.s32.totalorder %s18, 1
      %p114 = por %p112, %p113
      %p116 = scmp.ne.s32.totalorder %s99, %s115
      %p117 = scmp.eq.s32.totalorder %s18, 0
      %p118 = por %p116, %p117
      %p119 = scmp.le.s32.totalorder 1, %s12
      %p120 = scmp.lt.s32.totalorder %s12, 3
      %p121 = pnand %p119, %p120
      %p122 = pneg %p121
      // Predicated region
      $region9: #{composition_prompt_forward.1} parent=5 // pred_check
        _
      $region10: #{composition_prompt_forward.1} parent=5 // pred_check_branch
        %124 = sbr.rel (%p121) target = $region12
      $region11: #{composition_prompt_forward.1} parent=5 // pred_region
        %s125 = ssub.s32 %s12, 1
        // Predicated region
        $region13: #{composition_prompt_forward.1} parent=11 // pred_check
          %p126 = pneg %p33
        $region14: #{composition_prompt_forward.1} parent=11 // pred_check_branch
          %128 = sbr.rel (%p126) target = $region16
        $region15: #{composition_prompt_forward.1} parent=11 // pred_region
          _
        $region16: #{composition_prompt_forward.1} parent=11 // pred_fallthru
          _
      $region12: #{composition_prompt_forward.1} parent=5 // pred_fallthru
        _
      %p129 = scmp.lt.s32.totalorder %s12, 2
      // Predicated region
      $region17: #{composition_prompt_forward.1} parent=5 // pred_check
        %p130 = pneg %p129
      $region18: #{composition_prompt_forward.1} parent=5 // pred_check_branch
        %132 = sbr.rel (%p130) target = $region20
      $region19: #{composition_prompt_forward.1} parent=5 // pred_region
        // Predicated region
        $region21: #{composition_prompt_forward.1} parent=19 // pred_check
          %p133 = pneg %p53
        $region22: #{composition_prompt_forward.1} parent=19 // pred_check_branch
          %135 = sbr.rel (%p133) target = $region24
        $region23: #{composition_prompt_forward.1} parent=19 // pred_region
          %s136 = smul.u32 10, %s12
          %p137 = scmp.lt.s32.totalorder %s136, 19
          %s138 = scalar_select %p137, %s136, 19
          %s139 = scalar_lea.vmem %s1, %s138
          %s140 = smul.u32 10, %s12
        $region24: #{composition_prompt_forward.1} parent=19 // pred_fallthru
          _
        // Predicated region
        $region25: #{composition_prompt_forward.1} parent=19 // pred_check
          %p141 = pneg %p79
        $region26: #{composition_prompt_forward.1} parent=19 // pred_check_branch
          %143 = sbr.rel (%p141) target = $region28
        $region27: #{composition_prompt_forward.1} parent=19 // pred_region
          %s144 = smul.u32 10, %s12
          %p145 = scmp.lt.s32.totalorder %s144, 19
          %s146 = scalar_select %p145, %s144, 19
          %s147 = scalar_lea.vmem %s2, %s146
          %s148 = smul.u32 10, %s12
        $region28: #{composition_prompt_forward.1} parent=19 // pred_fallthru
          _
      $region20: #{composition_prompt_forward.1} parent=5 // pred_fallthru
        _
      %p149 = scmp.le.s32.totalorder 1, %s12
      %p150 = scmp.lt.s32.totalorder %s12, 3
      %p151 = pnand %p149, %p150
      %p152 = pneg %p151
      // Predicated region
      $region29: #{composition_prompt_forward.1} parent=5 // pred_check
        _
      $region30: #{composition_prompt_forward.1} parent=5 // pred_check_branch
        %154 = sbr.rel (%p151) target = $region32
      $region31: #{composition_prompt_forward.1} parent=5 // pred_region
        %s155 = ssub.s32 %s12, 1
        %p156 = pneg %p33
        %p157 = pneg %p30
        %s158 = smul.u32 10, %s17
        %p159 = scmp.lt.s32.totalorder %s158, 19
        %s160 = scalar_select %p159, %s158, 19
        %s161 = scalar_lea.vmem %s1, %s160
        %p162 = pneg %p59
        %p163 = pneg %p56
        %s164 = smul.u32 10, %s17
        %p165 = scmp.lt.s32.totalorder %s164, 19
        %s166 = scalar_select %p165, %s164, 19
        %s167 = scalar_lea.vmem %s2, %s166
        %p168 = pneg %p85
        %p169 = pneg %p82
        %p170 = pneg %p111
        %p171 = pneg %p108
        %s172 = sand.u32 %s98, 1
        %s173 = scalar_lea.sflag [#allocation3], %s172
        %s174 = sand.u32 %s98, 1
        %s175 = smul.addr %s174, 160
        %s176 = scalar_lea.vmem [#allocation2], %s175
        %s177 = smul.u32 10, %s17
        %p178 = scmp.lt.s32.totalorder %s177, 19
        %s179 = scalar_select %p178, %s177, 19
        %s180 = scalar_lea.vmem %s1, %s179
        %s181 = smul.u32 10, %s17
        %s182 = smul.u32 10, %s17
        %p183 = scmp.lt.s32.totalorder %s182, 19
        %s184 = scalar_select %p183, %s182, 19
        %s185 = scalar_lea.vmem %s2, %s184
        %s186 = smul.u32 10, %s17
        %s187 = smul.u32 10, %s17
        %v188 = vld [vmem:[%s0] sm:$0xff]
        %v189 = vld [vmem:[%s0 + $0x8] sm:$0xff]
        %190 = vst [vmem:[%s176] sm:$0x7] %v188
        %191 = vst [vmem:[%s176 + $0x10] sm:$0x7] %v188
        %192 = vst [vmem:[%s176 + $0x20] sm:$0x7] %v188
        %193 = vst [vmem:[%s176 + $0x30] sm:$0x7] %v188
        %194 = vst [vmem:[%s176 + $0x40] sm:$0x7] %v188
        %195 = vst [vmem:[%s176 + $0x50] sm:$0x7] %v188
        %196 = vst [vmem:[%s176 + $0x60] sm:$0x7] %v188
        %197 = vst [vmem:[%s176 + $0x70] sm:$0x7] %v188
        %198 = vst [vmem:[%s176 + $0x80] sm:$0x7] %v188
        %199 = vst [vmem:[%s176 + $0x90] sm:$0x7] %v188
        %v200 = vld [vmem:[%s180] sm:$0x1]
        %v201 = vld [vmem:[%s180 + $0x1] sm:$0x1]
        %v202 = vld [vmem:[%s180 + $0x2] sm:$0x1]
        %v203 = vld [vmem:[%s180 + $0x3] sm:$0x1]
        %v204 = vld [vmem:[%s180 + $0x4] sm:$0x1]
        %v205 = vld [vmem:[%s180 + $0x5] sm:$0x1]
        %v206 = vld [vmem:[%s180 + $0x6] sm:$0x1]
        %v207 = vld [vmem:[%s180 + $0x7] sm:$0x1]
        %v208 = vld [vmem:[%s180 + $0x8] sm:$0x1]
        %v209 = vld [vmem:[%s180 + $0x9] sm:$0x1]
        %210 = vst [vmem:[%s176 + $0x3] sm:$0x1] %v200
        %211 = vst [vmem:[%s176 + $0x13] sm:$0x1] %v201
        %212 = vst [vmem:[%s176 + $0x23] sm:$0x1] %v202
        %213 = vst [vmem:[%s176 + $0x33] sm:$0x1] %v203
        %214 = vst [vmem:[%s176 + $0x43] sm:$0x1] %v204
        %215 = vst [vmem:[%s176 + $0x53] sm:$0x1] %v205
        %216 = vst [vmem:[%s176 + $0x63] sm:$0x1] %v206
        %217 = vst [vmem:[%s176 + $0x73] sm:$0x1] %v207
        %218 = vst [vmem:[%s176 + $0x83] sm:$0x1] %v208
        %219 = vst [vmem:[%s176 + $0x93] sm:$0x1] %v209
        %220 = vst [vmem:[%s176] sm:$0x70] %v188
        %221 = vst [vmem:[%s176 + $0x10] sm:$0x70] %v188
        %222 = vst [vmem:[%s176 + $0x20] sm:$0x70] %v188
        %223 = vst [vmem:[%s176 + $0x30] sm:$0x70] %v188
        %224 = vst [vmem:[%s176 + $0x40] sm:$0x70] %v188
        %225 = vst [vmem:[%s176 + $0x50] sm:$0x70] %v188
        %226 = vst [vmem:[%s176 + $0x60] sm:$0x70] %v188
        %227 = vst [vmem:[%s176 + $0x70] sm:$0x70] %v188
        %228 = vst [vmem:[%s176 + $0x80] sm:$0x70] %v188
        %229 = vst [vmem:[%s176 + $0x90] sm:$0x70] %v188
        %v230 = vld [vmem:[%s185] sm:$0x1]
        %v231 = vld [vmem:[%s185 + $0x1] sm:$0x1]
        %v232 = vld [vmem:[%s185 + $0x2] sm:$0x1]
        %v233 = vld [vmem:[%s185 + $0x3] sm:$0x1]
        %v234 = vld [vmem:[%s185 + $0x4] sm:$0x1]
        %v235 = vld [vmem:[%s185 + $0x5] sm:$0x1]
        %v236 = vld [vmem:[%s185 + $0x6] sm:$0x1]
        %v237 = vld [vmem:[%s185 + $0x7] sm:$0x1]
        %v238 = vld [vmem:[%s185 + $0x8] sm:$0x1]
        %v239 = vld [vmem:[%s185 + $0x9] sm:$0x1]
        %240 = vst [vmem:[%s176 + $0x7] sm:$0x1] %v230
        %241 = vst [vmem:[%s176 + $0x17] sm:$0x1] %v231
        %242 = vst [vmem:[%s176 + $0x27] sm:$0x1] %v232
        %243 = vst [vmem:[%s176 + $0x37] sm:$0x1] %v233
        %244 = vst [vmem:[%s176 + $0x47] sm:$0x1] %v234
        %245 = vst [vmem:[%s176 + $0x57] sm:$0x1] %v235
        %246 = vst [vmem:[%s176 + $0x67] sm:$0x1] %v236
        %247 = vst [vmem:[%s176 + $0x77] sm:$0x1] %v237
        %248 = vst [vmem:[%s176 + $0x87] sm:$0x1] %v238
        %249 = vst [vmem:[%s176 + $0x97] sm:$0x1] %v239
        %250 = vst [vmem:[%s176 + $0x8] sm:$0xff] %v189
        %251 = vst [vmem:[%s176 + $0x18] sm:$0xff] %v189
        %252 = vst [vmem:[%s176 + $0x28] sm:$0xff] %v189
        %253 = vst [vmem:[%s176 + $0x38] sm:$0xff] %v189
        %254 = vst [vmem:[%s176 + $0x48] sm:$0xff] %v189
        %255 = vst [vmem:[%s176 + $0x58] sm:$0xff] %v189
        %256 = vst [vmem:[%s176 + $0x68] sm:$0xff] %v189
        %257 = vst [vmem:[%s176 + $0x78] sm:$0xff] %v189
        %258 = vst [vmem:[%s176 + $0x88] sm:$0xff] %v189
        %259 = vst [vmem:[%s176 + $0x98] sm:$0xff] %v189
        %s260 = sand.u32 %s98, 1
        %s261 = scalar_lea.sflag [#allocation3], %s260
        %s262 = sand.u32 %s98, 1
        %s263 = smul.addr %s262, 160
        %s264 = scalar_lea.vmem [#allocation2], %s263
        // Predicated region
        $region33: #{composition_prompt_forward.1} parent=31 // pred_check
          %p265 = pneg %p108
        $region34: #{composition_prompt_forward.1} parent=31 // pred_check_branch
          %267 = sbr.rel (%p265) target = $region36
        $region35: #{composition_prompt_forward.1} parent=31 // pred_region
          %s268 = smul.u32 10, %s17
          %s270 = ssub.s32 2560, 2560
          %271 = vsyncadd %s261, %s270
          %s272 = smul.addr %s268, 2
          %s273 = smul.addr %s272, 128
          %s274 = scalar_lea.hbm %s3, %s273
          %s275 = sshll.u32 %s264, 4
          %s276 = int_to_ptr.vmem [resolvable:$true] %s275
          %281 = dma.vmem_to_hbm [thread:$0]  %s276, 2560, %s274, %s261, 128, 128, 8
        $region36: #{composition_prompt_forward.1} parent=31 // pred_fallthru
          _
      $region32: #{composition_prompt_forward.1} parent=5 // pred_fallthru
        _
      %p282 = scmp.le.s32.totalorder 2, %s12
      // Predicated region
      $region37: #{composition_prompt_forward.1} parent=5 // pred_check
        %p283 = pneg %p282
      $region38: #{composition_prompt_forward.1} parent=5 // pred_check_branch
        %285 = sbr.rel (%p283) target = $region40
      $region39: #{composition_prompt_forward.1} parent=5 // pred_region
        %s286 = ssub.s32 %s12, 2
        // Predicated region
        $region41: #{composition_prompt_forward.1} parent=39 // pred_check
          %p287 = pneg %p114
        $region42: #{composition_prompt_forward.1} parent=39 // pred_check_branch
          %289 = sbr.rel (%p287) target = $region44
        $region43: #{composition_prompt_forward.1} parent=39 // pred_region
          %s290 = sand.u32 %s99, 1
          %s291 = scalar_lea.sflag [#allocation3], %s290
          %s292 = sand.u32 %s99, 1
          %s293 = smul.addr %s292, 160
          %s294 = scalar_lea.vmem [#allocation2], %s293
          %295 = dma.done %s291, 2560
        $region44: #{composition_prompt_forward.1} parent=39 // pred_fallthru
          _
      $region40: #{composition_prompt_forward.1} parent=5 // pred_fallthru
        _
    $region6: #{composition_prompt_forward.1} parent=1 // loop_footer
      %s16 = sadd.s32 1, %s12
    $region7: #{composition_prompt_forward.1} parent=1 // loop_footer_branch
      %11 = sbr.rel target = $region3
    $region8: #{composition_prompt_forward.1} parent=1 // loop_exit
      _
    %296 = vsyncpa [#allocation3], 1
    %s297 = scalar_lea.sflag [#allocation3], 1
    %298 = vsyncpa %s297, 1

</llo_original>
